<compile_context>
chip_gen: v7x
topology: tpu7x:2x2x1
jax: 0.10.0
libtpu: 0.0.40
codegen_flags: <defaults>
</compile_context>

<pallas_src>
import functools

import jax
import jax.numpy as jnp
from jax.experimental import pallas as pl
from jax.experimental.pallas import tpu as pltpu


def _cdiv(a, b):
    return -(-a // b)


def _round_up(x, m):
    return ((x + m - 1) // m) * m


def _focal_loss_kernel(logits_ref, targets_ref, alphas_ref, out_ref, acc_ref, *,
                       gamma: float, batch_size: int, tiles_per_split: int):
    s = pl.program_id(0)          # parallel split (one per TensorCore on v7x)
    t = pl.program_id(1)          # batch-tile accumulation axis ("arbitrary")

    @pl.when(t == 0)
    def _():
        acc_ref[...] = jnp.zeros_like(acc_ref)

    logits = logits_ref[...].astype(jnp.float32)      # (TB, C)
    tgt = targets_ref[...]                            # (TB, 1) int32
    alphas = alphas_ref[...].astype(jnp.float32)      # (1, C)
    TB, C = logits.shape

    # log-softmax along the class (lane) axis
    m = jnp.max(logits, axis=-1, keepdims=True)
    shifted = logits - m
    lse = jnp.log(jnp.sum(jnp.exp(shifted), axis=-1, keepdims=True))
    log_sm = shifted - lse                            # (TB, C)

    # gather at target index via masked select (safe for -inf logits, no
    # one-hot cast / extra full-tile multiplies)
    col = jax.lax.broadcasted_iota(jnp.int32, (TB, C), 1)
    is_tgt = col == tgt                               # (TB, C) bool
    logpt = jnp.sum(jnp.where(is_tgt, log_sm, 0.0), axis=-1, keepdims=True)
    alpha_t = jnp.sum(jnp.where(is_tgt, alphas, 0.0), axis=-1, keepdims=True)

    pt = jnp.exp(logpt)
    ce_loss = -logpt
    one_minus_pt = 1.0 - pt
    g = float(gamma)
    if g == 0.0:
        focal = jnp.ones_like(one_minus_pt)
    elif g == 1.0:
        focal = one_minus_pt
    elif g == 2.0:
        focal = one_minus_pt * one_minus_pt           # plain VPU mul, no pow
    else:
        focal = jnp.exp(g * jnp.log(jnp.maximum(one_minus_pt, 1e-30)))
    loss = alpha_t * focal * ce_loss                  # (TB, 1)

    # zero out rows that are pure batch padding
    row0 = (s * tiles_per_split + t) * TB
    rows = row0 + jax.lax.broadcasted_iota(jnp.int32, (TB, 1), 0)
    loss = jnp.where(rows < batch_size, loss, 0.0)

    acc_ref[...] += jnp.sum(loss, keepdims=True)      # (1, 1) running partial

    @pl.when(t == tiles_per_split - 1)
    def _():
        # one (8, 128) output block per split; only [0, 0] of the block is used
        out_ref[...] = jnp.broadcast_to(acc_ref[...], out_ref.shape)


def focal_loss(logits, targets, alphas, gamma=2.0, reduction="mean",
               num_splits=2, max_rows_per_tile=512):
    """Pallas focal loss.

    logits:  [B, C] float (f32 or bf16; upcast to f32 in-kernel)
    targets: [B]    int
    alphas:  [C]    float (per-class weights)
    returns: scalar float32
    """
    assert reduction in ("mean", "sum"), f"Unsupported reduction {reduction}"
    B, C = logits.shape
    in_itemsize = jnp.dtype(logits.dtype).itemsize

    # Batch-tile rows: large enough to approach the HBM roofline, small enough
    # that the double-buffered logits tile stays well inside scoped VMEM on
    # every generation (v7x has only 64 MiB physical / 32 MiB scoped).
    vmem_budget = 6 * 1024 * 1024
    tb_cap = max(8, (vmem_budget // (2 * C * in_itemsize)) // 8 * 8)
    tb = min(max_rows_per_tile, tb_cap,
             _round_up(max(_cdiv(B, num_splits), 1), 8))
    tb = max(tb, 8)

    tiles_per_split = _cdiv(_cdiv(B, tb), num_splits)
    padded_b = num_splits * tiles_per_split * tb

    logits_p = jnp.pad(logits, ((0, padded_b - B), (0, 0)))
    targets_p = jnp.pad(targets.astype(jnp.int32).reshape(B, 1),
                        ((0, padded_b - B), (0, 0)))
    alphas_2d = alphas.astype(jnp.float32).reshape(1, C)

    kernel = functools.partial(_focal_loss_kernel, gamma=float(gamma),
                               batch_size=B, tiles_per_split=tiles_per_split)

    out = pl.pallas_call(
        kernel,
        out_shape=jax.ShapeDtypeStruct((num_splits * 8, 128), jnp.float32),
        grid=(num_splits, tiles_per_split),
        in_specs=[
            pl.BlockSpec((tb, C), lambda s, t: (s * tiles_per_split + t, 0)),
            pl.BlockSpec((tb, 1), lambda s, t: (s * tiles_per_split + t, 0)),
            pl.BlockSpec((1, C), lambda s, t: (0, 0)),   # alphas stay resident
        ],
        out_specs=pl.BlockSpec((8, 128), lambda s, t: (s, 0)),
        scratch_shapes=[pltpu.VMEM((1, 1), jnp.float32)],
        compiler_params=pltpu.CompilerParams(
            dimension_semantics=("parallel", "arbitrary"),
            vmem_limit_bytes=32 * 1024 * 1024),
    )(logits_p, targets_p, alphas_2d)

    total = jnp.sum(out[::8, 0])        # one partial sum per parallel split
    if reduction == "mean":
        total = total * jnp.float32(1.0 / B)   # compile-time constant scale
    return total


def _focal_loss_ref(logits, targets, alphas, gamma=2.0, reduction="mean"):
    """Pure-JAX reference mirroring the PyTorch module."""
    log_sm = jax.nn.log_softmax(logits.astype(jnp.float32), axis=-1)
    logpt = jnp.take_along_axis(log_sm, targets.reshape(-1, 1), axis=-1)[:, 0]
    pt = jnp.exp(logpt)
    ce = -logpt
    a = alphas.astype(jnp.float32)[targets]
    loss = a * (1.0 - pt) ** gamma * ce
    return loss.mean() if reduction == "mean" else loss.sum()


if __name__ == "__main__":
    B, C = 8, 16
    key = jax.random.PRNGKey(0)
    k_logits, k_targets = jax.random.split(key)

    logits = jax.random.normal(k_logits, (B, C), dtype=jnp.float32)
    targets = jax.random.randint(k_targets, (B,), 0, C, dtype=jnp.int32)
    # Deterministic per-class weights (stands in for the config "alphas" list).
    alphas = jnp.linspace(0.05, 1.0, C, dtype=jnp.float32)

    out = focal_loss(logits, targets, alphas, gamma=2.0, reduction="mean")
    out = jax.block_until_ready(out)
    ref = _focal_loss_ref(logits, targets, alphas, gamma=2.0, reduction="mean")
    assert jnp.allclose(out, ref, rtol=1e-5, atol=1e-6), (out, ref)

    # Exercise the generic-gamma path and sum reduction as well.
    out_sum = focal_loss(logits, targets, alphas, gamma=1.5, reduction="sum")
    out_sum = jax.block_until_ready(out_sum)
    ref_sum = _focal_loss_ref(logits, targets, alphas, gamma=1.5, reduction="sum")
    assert jnp.allclose(out_sum, ref_sum, rtol=1e-5, atol=1e-5), (out_sum, ref_sum)

    print("KERNEL_OK")
</pallas_src>

<mosaic_0001>
module attributes {stable_mosaic.version = 11 : i64} {
  func.func @_focal_loss_kernel(%arg0: i32, %arg1: i32, %arg2: memref<8x16xf32, #tpu.memory_space<vmem>>, %arg3: memref<8x1xi32, #tpu.memory_space<vmem>>, %arg4: memref<1x16xf32, #tpu.memory_space<vmem>>, %arg5: memref<8x128xf32, #tpu.memory_space<vmem>>, %arg6: memref<1x1xf32, #tpu.memory_space<vmem>>) attributes {dimension_semantics = [#tpu.dimension_semantics<parallel>, #tpu.dimension_semantics<arbitrary>], iteration_bounds = array<i64: 2, 1>, scalar_prefetch = 0 : i64, scratch_operands = 1 : i64, tpu.core_type = #tpu.core_type<tc>, window_params = [{transform_indices = @transform_0, window_bounds = array<i64: 8, 16>}, {transform_indices = @transform_1, window_bounds = array<i64: 8, 1>}, {pipeline_mode = #tpu.pipeline_mode<synchronous>, transform_indices = @transform_2, window_bounds = array<i64: 1, 16>}, {transform_indices = @transform_3, window_bounds = array<i64: 8, 128>}]} {
    %c0_i32 = arith.constant 0 : i32
    %0 = arith.cmpi eq, %arg1, %c0_i32 : i32
    %1 = arith.extui %0 : i1 to i32
    %c0_i32_0 = arith.constant 0 : i32
    %2 = arith.cmpi ne, %1, %c0_i32_0 : i32
    scf.if %2 {
      %cst_22 = arith.constant 0.000000e+00 : f32
      %58 = vector.broadcast %cst_22 : f32 to vector<1x1xf32>
      %c0_23 = arith.constant 0 : index
      %c0_24 = arith.constant 0 : index
      %59 = vector.load %arg6[%c0_23, %c0_24] : memref<1x1xf32, #tpu.memory_space<vmem>>, vector<1x1xf32>
      tpu.vector_store %arg6[%c0_23, %c0_24], %58 {strides = array<i32>} : memref<1x1xf32, #tpu.memory_space<vmem>>, vector<1x1xf32>,
    } else {
    }
    %c0 = arith.constant 0 : index
    %c0_1 = arith.constant 0 : index
    %3 = vector.load %arg2[%c0, %c0_1] : memref<8x16xf32, #tpu.memory_space<vmem>>, vector<8x16xf32>
    %c0_2 = arith.constant 0 : index
    %c0_3 = arith.constant 0 : index
    %4 = vector.load %arg3[%c0_2, %c0_3] : memref<8x1xi32, #tpu.memory_space<vmem>>, vector<8x1xi32>
    %c0_4 = arith.constant 0 : index
    %c0_5 = arith.constant 0 : index
    %5 = vector.load %arg4[%c0_4, %c0_5] : memref<1x16xf32, #tpu.memory_space<vmem>>, vector<1x16xf32>
    %cst = arith.constant dense<0xFF800000> : vector<8xf32>
    %6 = vector.multi_reduction <maximumf>, %3, %cst [1] : vector<8x16xf32> to vector<8xf32>
    %7 = vector.shape_cast %6 : vector<8xf32> to vector<8x1xf32>
    %8 = vector.broadcast %7 : vector<8x1xf32> to vector<8x16xf32>
    %9 = arith.subf %3, %8 : vector<8x16xf32>
    %10 = math.exp %9 : vector<8x16xf32>
    %cst_6 = arith.constant dense<0.000000e+00> : vector<8xf32>
    %11 = vector.multi_reduction <add>, %10, %cst_6 [1] : vector<8x16xf32> to vector<8xf32>
    %12 = vector.shape_cast %11 : vector<8xf32> to vector<8x1xf32>
    %13 = math.log %12 : vector<8x1xf32>
    %14 = vector.broadcast %13 : vector<8x1xf32> to vector<8x16xf32>
    %15 = arith.subf %9, %14 : vector<8x16xf32>
    %16 = tpu.iota {dimensions = array<i32: 1>} : vector<8x16xi32>
    %17 = vector.broadcast %4 : vector<8x1xi32> to vector<8x16xi32>
    %18 = arith.cmpi eq, %16, %17 : vector<8x16xi32>
    %cst_7 = arith.constant 0.000000e+00 : f32
    %19 = vector.broadcast %cst_7 : f32 to vector<8x16xf32>
    %20 = arith.select %18, %15, %19 : vector<8x16xi1>, vector<8x16xf32>
    %cst_8 = arith.constant dense<0.000000e+00> : vector<8xf32>
    %21 = vector.multi_reduction <add>, %20, %cst_8 [1] : vector<8x16xf32> to vector<8xf32>
    %22 = vector.shape_cast %21 : vector<8xf32> to vector<8x1xf32>
    %cst_9 = arith.constant 0.000000e+00 : f32
    %23 = vector.shape_cast %5 : vector<1x16xf32> to vector<1x16xf32>
    %24 = vector.broadcast %23 : vector<1x16xf32> to vector<8x16xf32>
    %25 = vector.broadcast %cst_9 : f32 to vector<8x16xf32>
    %26 = arith.select %18, %24, %25 : vector<8x16xi1>, vector<8x16xf32>
    %cst_10 = arith.constant dense<0.000000e+00> : vector<8xf32>
    %27 = vector.multi_reduction <add>, %26, %cst_10 [1] : vector<8x16xf32> to vector<8xf32>
    %28 = vector.shape_cast %27 : vector<8xf32> to vector<8x1xf32>
    %29 = math.exp %22 : vector<8x1xf32>
    %cst_11 = arith.constant 0.000000e+00 : f32
    %30 = vector.broadcast %cst_11 : f32 to vector<8x1xf32>
    %31 = arith.subf %30, %22 : vector<8x1xf32>
    %cst_12 = arith.constant 1.000000e+00 : f32
    %32 = vector.broadcast %cst_12 : f32 to vector<8x1xf32>
    %33 = arith.subf %32, %29 : vector<8x1xf32>
    %34 = arith.mulf %33, %33 : vector<8x1xf32>
    %35 = arith.mulf %28, %34 : vector<8x1xf32>
    %36 = arith.mulf %35, %31 : vector<8x1xf32>
    %c1_i32 = arith.constant 1 : i32
    %37 = arith.muli %arg0, %c1_i32 : i32
    %38 = arith.addi %37, %arg1 : i32
    %c8_i32 = arith.constant 8 : i32
    %39 = arith.muli %38, %c8_i32 : i32
    %40 = tpu.iota {dimensions = array<i32: 0>} : vector<8x1xi32>
    %41 = vector.broadcast %39 : i32 to vector<8x1xi32>
    %42 = arith.addi %41, %40 : vector<8x1xi32>
    %c8_i32_13 = arith.constant 8 : i32
    %43 = vector.broadcast %c8_i32_13 : i32 to vector<8x1xi32>
    %44 = arith.cmpi slt, %42, %43 : vector<8x1xi32>
    %cst_14 = arith.constant 0.000000e+00 : f32
    %45 = vector.broadcast %cst_14 : f32 to vector<8x1xf32>
    %46 = arith.select %44, %36, %45 : vector<8x1xi1>, vector<8x1xf32>
    %c0_15 = arith.constant 0 : index
    %c0_16 = arith.constant 0 : index
    %47 = vector.load %arg6[%c0_15, %c0_16] : memref<1x1xf32, #tpu.memory_space<vmem>>, vector<1x1xf32>
    %48 = vector.shape_cast %46 : vector<8x1xf32> to vector<1x8x1xf32>
    %cst_17 = arith.constant dense<0.000000e+00> : vector<1xf32>
    %49 = vector.multi_reduction <add>, %48, %cst_17 [1, 2] : vector<1x8x1xf32> to vector<1xf32>
    %50 = vector.shape_cast %49 : vector<1xf32> to vector<1x1x1xf32>
    %51 = vector.extract %50[0, 0, 0] : f32 from vector<1x1x1xf32>
    %52 = vector.broadcast %51 : f32 to vector<1x1xf32>
    %53 = arith.addf %47, %52 : vector<1x1xf32>
    %c0_18 = arith.constant 0 : index
    %c0_19 = arith.constant 0 : index
    %54 = vector.load %arg6[%c0_18, %c0_19] : memref<1x1xf32, #tpu.memory_space<vmem>>, vector<1x1xf32>
    tpu.vector_store %arg6[%c0_18, %c0_19], %53 {strides = array<i32>} : memref<1x1xf32, #tpu.memory_space<vmem>>, vector<1x1xf32>,
    %c0_i32_20 = arith.constant 0 : i32
    %55 = arith.cmpi eq, %arg1, %c0_i32_20 : i32
    %56 = arith.extui %55 : i1 to i32
    %c0_i32_21 = arith.constant 0 : i32
    %57 = arith.cmpi ne, %56, %c0_i32_21 : i32
    scf.if %57 {
      %c0_22 = arith.constant 0 : index
      %c0_23 = arith.constant 0 : index
      %58 = vector.load %arg6[%c0_22, %c0_23] : memref<1x1xf32, #tpu.memory_space<vmem>>, vector<1x1xf32>
      %59 = vector.shape_cast %58 : vector<1x1xf32> to vector<1x1xf32>
      %60 = vector.broadcast %59 : vector<1x1xf32> to vector<8x128xf32>
      %c0_24 = arith.constant 0 : index
      %c0_25 = arith.constant 0 : index
      %61 = vector.load %arg5[%c0_24, %c0_25] : memref<8x128xf32, #tpu.memory_space<vmem>>, vector<8x128xf32>
      tpu.vector_store %arg5[%c0_24, %c0_25], %60 {strides = array<i32>} : memref<8x128xf32, #tpu.memory_space<vmem>>, vector<8x128xf32>,
    } else {
    }
    return
  }
  func.func @transform_0(%arg0: i32, %arg1: i32) -> (i32, i32) {
    %c1_i32 = arith.constant 1 : i32
    %0 = arith.muli %arg0, %c1_i32 : i32
    %1 = arith.addi %0, %arg1 : i32
    %c0_i32 = arith.constant 0 : i32
    %c0_i32_0 = arith.constant 0 : i32
    return %1, %c0_i32 : i32, i32
  }
  func.func @transform_1(%arg0: i32, %arg1: i32) -> (i32, i32) {
    %c1_i32 = arith.constant 1 : i32
    %0 = arith.muli %arg0, %c1_i32 : i32
    %1 = arith.addi %0, %arg1 : i32
    %c0_i32 = arith.constant 0 : i32
    %c0_i32_0 = arith.constant 0 : i32
    return %1, %c0_i32 : i32, i32
  }
  func.func @transform_2(%arg0: i32, %arg1: i32) -> (i32, i32) {
    %c0_i32 = arith.constant 0 : i32
    %c0_i32_0 = arith.constant 0 : i32
    %c0_i32_1 = arith.constant 0 : i32
    return %c0_i32, %c0_i32_0 : i32, i32
  }
  func.func @transform_3(%arg0: i32, %arg1: i32) -> (i32, i32) {
    %c0_i32 = arith.constant 0 : i32
    %c0_i32_0 = arith.constant 0 : i32
    return %arg0, %c0_i32 : i32, i32
  }
}

</mosaic_0001>

<llo_original>
// kernel: tpu_custom_call.1
$region0: #{tpu_custom_call.1}
  #allocation0 [shape = 'u32[]', space=smem, size = 0x4, offset = 0x4, fixed_abs, tag = 'smem constant byte address 0x4 - core index']
  #allocation1 [shape = 'u32[144,128]{1,0:T(1,128)}', space=vmem, size = 0x12000, scoped, tag = 'internal scratch']
  #allocation2 [shape = 'f32[1,1]{1,0:T(1,128)}', space=vmem, size = 0x200, scoped, tag = 'scratch operand']
  %s0 = inlined_call_operand.vmem [shape: f32[16,16], index: 0, kind: input, shape index: {}]
  %s1 = inlined_call_operand.vmem [shape: s32[16,1], index: 1, kind: input, shape index: {}]
  %s2 = inlined_call_operand.vmem [shape: f32[1,16], index: 2, kind: input, shape index: {}]
  %s3 = inlined_call_operand.hbm [shape: f32[16,128], index: 3, kind: output, shape index: {}]
  %s4 = sld [smem:[#allocation0]]
  $region53: #{tpu_custom_call.1} parent=0
    _
  %s6 = ssub.s32 1, %s4
  %s7 = scalar_select 0, %s6, %s4
  $region1: #{tpu_custom_call.1} parent=0
    #allocation3 [shape = 'u8[8192]{0}', space=vmem, size = 0x2000, scoped, tag = 'output window, operand 0']
    #allocation4 [shape = 's32[2]{0}', space=sflag, size = 0x8, scoped, tag = 'scoped memory for tpu_custom_call.1']
    %8 = vsyncpa [#allocation4], 0
    %s9 = scalar_lea.sflag [#allocation4], 1
    %10 = vsyncpa %s9, 0
    loop: start=0, step=1, limit=4
    $region2: #{tpu_custom_call.1} parent=1 // loop_pre_header
      _
    $region3: #{tpu_custom_call.1} parent=1 // loop_header
      %s12 = sphi 0, %s16
      %p13 = scmp.ge.s32.totalorder %s12, 4
      %s19 = sphi 0, %s31
      %s20 = sphi 0, %s27
      %s21 = sphi 0, %s19
      %s22 = sphi 0, %s20
      %s23 = sphi 0, %s21
      %s24 = sphi 0, %s22
      %s36 = sphi 0, %s38
      %s39 = sphi 0, %s36
      %s40 = sphi 0, %s39
      %s56 = sphi 0, %s40
      %s64 = sphi 0, %s66
      %s67 = sphi 0, %s64
      %s68 = sphi 0, %s67
      %s84 = sphi 0, %s68
      %s88 = sphi 0, %s88
      %s90 = sphi 0, %s88
      %s91 = sphi 0, %s90
      %s105 = sphi 0, %s91
      %s111 = sphi 0, %s113
      %s114 = sphi 0, %s111
      %s115 = sphi 0, %s114
      %s131 = sphi 0, %s115
    $region4: #{tpu_custom_call.1} parent=1 // loop_header_branch
      %15 = sbr.rel (%p13) target = $region8
    $region5: #{tpu_custom_call.1} parent=1 // loop_body
      %s17 = ssub.s32 %s12, 1
      %s18 = ssub.s32 %s12, 2
      %s25 = sadd.s32 1, %s20
      %p26 = scmp.ge.s32.totalorder %s25, 1
      %s27 = scalar_select %p26, 0, %s25
      %s28 = sadd.s32 1, %s19
      %s29 = scalar_select %p26, %s28, %s19
      %p30 = scmp.ge.s32.totalorder %s29, 2
      %s31 = scalar_select %p30, 0, %s29
      %s32 = sadd.s32 %s19, %s20
      %s33 = sadd.s32 %s31, %s27
      %s34 = ssub.s32 %s32, %s33
      %p35 = scmp.eq.s32.totalorder %s34, 0
      %s37 = sadd.s32 %s36, 1
      %s38 = scalar_select %p35, %s36, %s37
      %p41 = pneg %p35
      %p42 = scmp.eq.s32.totalorder %s12, 1
      %p43 = por %p41, %p42
      %p44 = scmp.ne.s32.totalorder %s36, %s39
      %p45 = scmp.eq.s32.totalorder %s12, 0
      %p46 = por %p44, %p45
      %p47 = scmp.ne.s32.totalorder %s36, %s39
      %p48 = scmp.eq.s32.totalorder %s17, 1
      %p49 = por %p47, %p48
      %p50 = scmp.ne.s32.totalorder %s39, %s40
      %p51 = scmp.eq.s32.totalorder %s17, 0
      %p52 = por %p50, %p51
      %p53 = scmp.ne.s32.totalorder %s39, %s40
      %p54 = scmp.eq.s32.totalorder %s18, 1
      %p55 = por %p53, %p54
      %p57 = scmp.ne.s32.totalorder %s40, %s56
      %p58 = scmp.eq.s32.totalorder %s18, 0
      %p59 = por %p57, %p58
      %s60 = sadd.s32 %s19, %s20
      %s61 = sadd.s32 %s31, %s27
      %s62 = ssub.s32 %s60, %s61
      %p63 = scmp.eq.s32.totalorder %s62, 0
      %s65 = sadd.s32 %s64, 1
      %s66 = scalar_select %p63, %s64, %s65
      %p69 = pneg %p63
      %p70 = scmp.eq.s32.totalorder %s12, 1
      %p71 = por %p69, %p70
      %p72 = scmp.ne.s32.totalorder %s64, %s67
      %p73 = scmp.eq.s32.totalorder %s12, 0
      %p74 = por %p72, %p73
      %p75 = scmp.ne.s32.totalorder %s64, %s67
      %p76 = scmp.eq.s32.totalorder %s17, 1
      %p77 = por %p75, %p76
      %p78 = scmp.ne.s32.totalorder %s67, %s68
      %p79 = scmp.eq.s32.totalorder %s17, 0
      %p80 = por %p78, %p79
      %p81 = scmp.ne.s32.totalorder %s67, %s68
      %p82 = scmp.eq.s32.totalorder %s18, 1
      %p83 = por %p81, %p82
      %p85 = scmp.ne.s32.totalorder %s68, %s84
      %p86 = scmp.eq.s32.totalorder %s18, 0
      %p87 = por %p85, %p86
      %s89 = sadd.s32 %s88, 1
      %p92 = scmp.eq.s32.totalorder %s12, 1
      %p93 = scmp.ne.s32.totalorder %s88, %s90
      %p94 = scmp.eq.s32.totalorder %s12, 0
      %p95 = por %p93, %p94
      %p96 = scmp.ne.s32.totalorder %s88, %s90
      %p97 = scmp.eq.s32.totalorder %s17, 1
      %p98 = por %p96, %p97
      %p99 = scmp.ne.s32.totalorder %s90, %s91
      %p100 = scmp.eq.s32.totalorder %s17, 0
      %p101 = por %p99, %p100
      %p102 = scmp.ne.s32.totalorder %s90, %s91
      %p103 = scmp.eq.s32.totalorder %s18, 1
      %p104 = por %p102, %p103
      %p106 = scmp.ne.s32.totalorder %s91, %s105
      %p107 = scmp.eq.s32.totalorder %s18, 0
      %p108 = por %p106, %p107
      %s109 = ssub.s32 %s19, %s31
      %p110 = scmp.eq.s32.totalorder %s109, 0
      %s112 = sadd.s32 %s111, 1
      %s113 = scalar_select %p110, %s111, %s112
      %p116 = pneg %p110
      %p117 = scmp.eq.s32.totalorder %s12, 1
      %p118 = por %p116, %p117
      %p119 = scmp.ne.s32.totalorder %s111, %s114
      %p120 = scmp.eq.s32.totalorder %s12, 0
      %p121 = por %p119, %p120
      %p122 = scmp.ne.s32.totalorder %s111, %s114
      %p123 = scmp.eq.s32.totalorder %s17, 1
      %p124 = por %p122, %p123
      %p125 = scmp.ne.s32.totalorder %s114, %s115
      %p126 = scmp.eq.s32.totalorder %s17, 0
      %p127 = por %p125, %p126
      %p128 = scmp.ne.s32.totalorder %s114, %s115
      %p129 = scmp.eq.s32.totalorder %s18, 1
      %p130 = por %p128, %p129
      %p132 = scmp.ne.s32.totalorder %s115, %s131
      %p133 = scmp.eq.s32.totalorder %s18, 0
      %p134 = por %p132, %p133
      %p135 = scmp.le.s32.totalorder 1, %s12
      %p136 = scmp.lt.s32.totalorder %s12, 3
      %p137 = pnand %p135, %p136
      %p138 = pneg %p137
      // Predicated region
      $region9: #{tpu_custom_call.1} parent=5 // pred_check
        _
      $region10: #{tpu_custom_call.1} parent=5 // pred_check_branch
        %140 = sbr.rel (%p137) target = $region12
      $region11: #{tpu_custom_call.1} parent=5 // pred_region
        %s141 = ssub.s32 %s12, 1
        // Predicated region
        $region13: #{tpu_custom_call.1} parent=11 // pred_check
          %p142 = pneg %p101
        $region14: #{tpu_custom_call.1} parent=11 // pred_check_branch
          %144 = sbr.rel (%p142) target = $region16
        $region15: #{tpu_custom_call.1} parent=11 // pred_region
          _
        $region16: #{tpu_custom_call.1} parent=11 // pred_fallthru
          _
      $region12: #{tpu_custom_call.1} parent=5 // pred_fallthru
        _
      %p145 = scmp.lt.s32.totalorder %s12, 2
      // Predicated region
      $region17: #{tpu_custom_call.1} parent=5 // pred_check
        %p146 = pneg %p145
      $region18: #{tpu_custom_call.1} parent=5 // pred_check_branch
        %148 = sbr.rel (%p146) target = $region20
      $region19: #{tpu_custom_call.1} parent=5 // pred_region
        // Predicated region
        $region21: #{tpu_custom_call.1} parent=19 // pred_check
          %p149 = pneg %p46
        $region22: #{tpu_custom_call.1} parent=19 // pred_check_branch
          %151 = sbr.rel (%p149) target = $region24
        $region23: #{tpu_custom_call.1} parent=19 // pred_region
          %s152 = sadd.s32 %s19, %s20
          %p153 = scmp.lt.s32.totalorder %s152, 1
          %s154 = scalar_select %p153, %s152, 1
          %s155 = smul.addr %s154, 8
          %s156 = scalar_lea.vmem %s0, %s155
          %s157 = sadd.s32 %s19, %s20
        $region24: #{tpu_custom_call.1} parent=19 // pred_fallthru
          _
        // Predicated region
        $region25: #{tpu_custom_call.1} parent=19 // pred_check
          %p158 = pneg %p74
        $region26: #{tpu_custom_call.1} parent=19 // pred_check_branch
          %160 = sbr.rel (%p158) target = $region28
        $region27: #{tpu_custom_call.1} parent=19 // pred_region
          %s161 = sadd.s32 %s19, %s20
          %p162 = scmp.lt.s32.totalorder %s161, 1
          %s163 = scalar_select %p162, %s161, 1
          %s164 = smul.addr %s163, 8
          %s165 = scalar_lea.vmem %s1, %s164
          %s166 = sadd.s32 %s19, %s20
        $region28: #{tpu_custom_call.1} parent=19 // pred_fallthru
          _
      $region20: #{tpu_custom_call.1} parent=5 // pred_fallthru
        _
      %p167 = scmp.le.s32.totalorder 1, %s12
      %p168 = scmp.lt.s32.totalorder %s12, 3
      %p169 = pnand %p167, %p168
      %p170 = pneg %p169
      // Predicated region
      $region29: #{tpu_custom_call.1} parent=5 // pred_check
        _
      $region30: #{tpu_custom_call.1} parent=5 // pred_check_branch
        %172 = sbr.rel (%p169) target = $region32
      $region31: #{tpu_custom_call.1} parent=5 // pred_region
        %s173 = ssub.s32 %s12, 1
        %s174 = sadd.s32 %s21, %s22
        %p175 = scmp.lt.s32.totalorder %s174, 1
        %s176 = scalar_select %p175, %s174, 1
        %s177 = smul.addr %s176, 8
        %s178 = scalar_lea.vmem %s0, %s177
        %p179 = pneg %p52
        %p180 = pneg %p49
        %s181 = sadd.s32 %s21, %s22
        %p182 = scmp.lt.s32.totalorder %s181, 1
        %s183 = scalar_select %p182, %s181, 1
        %s184 = smul.addr %s183, 8
        %s185 = scalar_lea.vmem %s1, %s184
        %p186 = pneg %p80
        %p187 = pneg %p77
        %p188 = pneg %p101
        %p189 = pneg %p98
        %p190 = pneg %p127
        %p191 = pneg %p124
        %s192 = sand.u32 %s114, 1
        %s193 = scalar_lea.sflag [#allocation4], %s192
        %s194 = sand.u32 %s114, 1
        %s195 = smul.addr %s194, 8
        %s196 = scalar_lea.vmem [#allocation3], %s195
        %s197 = sadd.s32 %s21, %s22
        %p198 = scmp.lt.s32.totalorder %s197, 1
        %s199 = scalar_select %p198, %s197, 1
        %s200 = smul.addr %s199, 8
        %s201 = scalar_lea.vmem %s0, %s200
        %s202 = sadd.s32 %s21, %s22
        %s203 = sadd.s32 %s21, %s22
        %p204 = scmp.lt.s32.totalorder %s203, 1
        %s205 = scalar_select %p204, %s203, 1
        %s206 = smul.addr %s205, 8
        %s207 = scalar_lea.vmem %s1, %s206
        %s208 = sadd.s32 %s21, %s22
        %p209 = scmp.eq.s32.totalorder %s22, 0
        // Predicated region
        $region33: #{tpu_custom_call.1} parent=31 // pred_check
          %p210 = pneg %p209
        $region34: #{tpu_custom_call.1} parent=31 // pred_check_branch
          %212 = sbr.rel (%p210) target = $region36
        $region35: #{tpu_custom_call.1} parent=31 // pred_region
          %vm213 = vcmask 0
          %214 = vst.msk [vmem:[#allocation2] sm:$0x1] %vm213, 0.0
        $region36: #{tpu_custom_call.1} parent=31 // pred_fallthru
          _
        %v215 = vld [vmem:[%s201] sm:$0xff]
        %v216 = vld [vmem:[%s207] sm:$0xff]
        %v217 = vld [vmem:[%s2] sm:$0x1]
        %vm218 = vcmask 130048
        %v219 = vsel %vm218, %v215, -inf
        %220 = vmax.xlane.f32.xlu0 %v219
        %v221 = vpop.xlane.xlu0 %220
        %v222 = vsub.f32 %v215, %v221
        %v223 = vmul.f32 %v222, 1.442695
        %v224 = vpow.pop %v223
        %v225 = vsel %vm218, %v224, 0.0
        %226 = vadd.xlane.f32.xlu0 %v225
        %v227 = vpop.xlane.xlu0 %226
        %v228 = vlog2.pop %v227
        %v229 = vmul.f32 %v228, 0.6931472
        %v230 = vsub.f32 %v222, %v229
        %v231 = vlaneseq
        %v232 = vand.u32 %v231, 127
        %233 = vset.pattern.permute.xlu0 0
        %234 = vperm.xlu0 %233, %v216
        %v235 = vpop.permute.xlu0 %234
        %vm236 = vcmp.eq.s32.totalorder %v232, %v235
        %v237 = vsel %vm236, %v230, 0.0
        %v238 = vsel %vm218, %v237, 0.0
        %239 = vadd.xlane.f32.xlu0 %v238
        %v240 = vpop.xlane.xlu0 %239
        %v242 = vlaneseq
        %v243 = vshrl.u32 %v242, 7
        %v244 = vsub.s32 0, %v243
        %v245 = vrot.slane %v217, %v244
        %v247 = vsel %vm236, %v245, 0.0
        %v248 = vsel %vm218, %v247, 0.0
        %249 = vadd.xlane.f32.xlu0 %v248
        %v250 = vpop.xlane.xlu0 %249
        %v251 = vmul.f32 %v240, 1.442695
        %v252 = vpow.pop %v251
        %v253 = vsub.f32 0.0, %v240
        %v254 = vsub.f32 1.0, %v252
        %v255 = vmul.f32 %v254, %v254
        %v256 = vmul.f32 %v250, %v255
        %v257 = vmul.f32 %v256, %v253
        %s258 = sadd.s32 %s21, %s22
        %s259 = smul.u32 %s258, 8
        %v260 = vlaneseq
        %v261 = vshrl.u32 %v260, 7
        %v262 = vstv %s259
        %v263 = vadd.s32 %v262, %v261
        %vm264 = vcmp.lt.s32.totalorder %v263, 8
        %v265 = vsel %vm264, %v257, 0.0
        %v266 = vld [vmem:[#allocation2] sm:$0x1]
        %vm267 = vcmask 7168
        %v268 = vsel %vm267, %v265, 0.0
        %269 = vadd.xlane.f32.xlu0 %v268
        %v270 = vpop.xlane.xlu0 %269
        %v271 = vrot.slane %v270, 4
        %v272 = vadd.f32 %v270, %v271
        %v273 = vrot.slane %v272, 2
        %v274 = vadd.f32 %v272, %v273
        %v275 = vrot.slane %v274, 1
        %v276 = vadd.f32 %v274, %v275
        %s277 = vtos %v276
        %v278 = vstv %s277
        %v279 = vadd.f32 %v266, %v278
        %vm280 = vcmask 0
        %281 = vst.msk [vmem:[#allocation2] sm:$0x1] %vm280, %v279
        // Predicated region
        $region37: #{tpu_custom_call.1} parent=31 // pred_check
          %p282 = pneg %p209
        $region38: #{tpu_custom_call.1} parent=31 // pred_check_branch
          %284 = sbr.rel (%p282) target = $region40
        $region39: #{tpu_custom_call.1} parent=31 // pred_region
          %v285 = vld [vmem:[#allocation2] sm:$0x1]
          %v287 = vlaneseq
          %v288 = vshrl.u32 %v287, 7
          %v289 = vsub.s32 0, %v288
          %v290 = vrot.slane %v285, %v289
          %291 = vset.pattern.permute.xlu0 0
          %292 = vperm.xlu0 %291, %v290
          %v293 = vpop.permute.xlu0 %292
          %295 = vst [vmem:[%s196] sm:$0xff] %v293
        $region40: #{tpu_custom_call.1} parent=31 // pred_fallthru
          _
        %s296 = sand.u32 %s114, 1
        %s297 = scalar_lea.sflag [#allocation4], %s296
        %s298 = sand.u32 %s114, 1
        %s299 = smul.addr %s298, 8
        %s300 = scalar_lea.vmem [#allocation3], %s299
        // Predicated region
        $region41: #{tpu_custom_call.1} parent=31 // pred_check
          %p301 = pneg %p124
        $region42: #{tpu_custom_call.1} parent=31 // pred_check_branch
          %303 = sbr.rel (%p301) target = $region44
        $region43: #{tpu_custom_call.1} parent=31 // pred_region
          %s305 = ssub.s32 128, 128
          %306 = vsyncadd %s297, %s305
          %s307 = smul.addr %s21, 128
          %s308 = scalar_lea.hbm %s3, %s307
          %s310 = sshll.u32 %s300, 4
          %s311 = int_to_ptr.vmem [resolvable:$true] %s310
          %313 = dma.vmem_to_hbm [thread:$0]  %s311, 128, %s308, %s297
        $region44: #{tpu_custom_call.1} parent=31 // pred_fallthru
          _
      $region32: #{tpu_custom_call.1} parent=5 // pred_fallthru
        _
      %p314 = scmp.le.s32.totalorder 2, %s12
      // Predicated region
      $region45: #{tpu_custom_call.1} parent=5 // pred_check
        %p315 = pneg %p314
      $region46: #{tpu_custom_call.1} parent=5 // pred_check_branch
        %317 = sbr.rel (%p315) target = $region48
      $region47: #{tpu_custom_call.1} parent=5 // pred_region
        %s318 = ssub.s32 %s12, 2
        // Predicated region
        $region49: #{tpu_custom_call.1} parent=47 // pred_check
          %p319 = pneg %p130
        $region50: #{tpu_custom_call.1} parent=47 // pred_check_branch
          %321 = sbr.rel (%p319) target = $region52
        $region51: #{tpu_custom_call.1} parent=47 // pred_region
          %s322 = sand.u32 %s115, 1
          %s323 = scalar_lea.sflag [#allocation4], %s322
          %s324 = sand.u32 %s115, 1
          %s325 = smul.addr %s324, 8
          %s326 = scalar_lea.vmem [#allocation3], %s325
          %327 = dma.done %s323, 128
        $region52: #{tpu_custom_call.1} parent=47 // pred_fallthru
          _
      $region48: #{tpu_custom_call.1} parent=5 // pred_fallthru
        _
    $region6: #{tpu_custom_call.1} parent=1 // loop_footer
      %s16 = sadd.s32 1, %s12
    $region7: #{tpu_custom_call.1} parent=1 // loop_footer_branch
      %11 = sbr.rel target = $region3
    $region8: #{tpu_custom_call.1} parent=1 // loop_exit
      _
    %328 = vsyncpa [#allocation4], 1
    %s329 = scalar_lea.sflag [#allocation4], 1
    %330 = vsyncpa %s329, 1

</llo_original>
